<compile_context>
chip_gen: v5e
topology: v5e:2x2
jax: 0.10.0
libtpu: 0.0.40
codegen_flags: <defaults>
</compile_context>

<pallas_src>
import math

import jax
import jax.numpy as jnp
from jax.experimental import pallas as pl
from jax.experimental.pallas import tpu as pltpu

# ---- MagFace hyper-parameters (same defaults as the PyTorch module) ----------
MARGIN_AM = 0.0
SCALE = 32.0
L_A = 10.0
U_A = 110.0
L_MARGIN = 0.45
U_MARGIN = 0.8
LAMDA = 20.0


def _round_up(x, m):
    return ((x + m - 1) // m) * m


def _vmem_budgets():
    """Generation-aware VMEM limits: ~96/80 MiB on 128-MiB parts (v5e/v6e),
    ~48/32 MiB on 64-MiB v7x.  Falls back conservatively if the query fails."""
    cap = None
    try:
        info = pltpu.get_tpu_info()
        cap = getattr(info, "vmem_capacity_bytes", None)
    except Exception:
        cap = None
    if not cap:
        cap = 64 * 1024 * 1024                      # conservative (v7x per-core VMEM)
    vmem_limit = int(min(cap * 3 // 4, 96 * 1024 * 1024))
    tile_budget = int(min(cap // 2, 80 * 1024 * 1024))
    return vmem_limit, tile_budget


def _pick_tiles(B, C, D, *, itemsize, vmem_tile_budget,
                max_batch_tile=256, min_grid_steps=8,
                target_tile_bytes=4 * 1024 * 1024):
    """Pick (batch_tile, class_tile).

    Priorities:
      1. Fit double-buffered weight/feats/logits tiles in the VMEM budget
         (shrink the batch tile, and fail loudly if even (8, 128) cannot fit).
      2. Keep >= min_grid_steps class tiles so the grid pipelines and the
         "parallel" class axis can shard across v7x's two TensorCores.
      3. Otherwise grow the class tile until each streamed weight tile is about
         `target_tile_bytes` to amortize the fixed per-grid-step overhead.
    """
    c_pad = _round_up(C, 128)
    # Prefer 256-wide class tiles (v6e/v7x MXU = 2x256x256) when that still
    # leaves >= min_grid_steps tiles; otherwise use the 128 (v5e) granule.
    granule = 256 if (c_pad // min_grid_steps) >= 256 else 128

    tb_candidates = ([B] if B <= max_batch_tile else []) + \
        [t for t in (max_batch_tile, 128, 64, 32, 16, 8) if t <= B]
    seen, tb_list = set(), []
    for t in tb_candidates:
        if t >= 1 and t not in seen:
            seen.add(t)
            tb_list.append(t)

    for tb in tb_list:
        if tb != B and tb % 8 != 0:
            continue                                      # (8,128) sublane constraint
        fixed = (2 * tb * D * itemsize                    # double-buffered feats tile
                 + 3 * 2 * tb * 128 * 4                   # labels/cos_m/sin_m (lane-padded)
                 + (2 << 20))                             # headroom / internal scratch
        per_tc = 2 * D * itemsize + 2 * tb * 4            # weight + logits, double-buffered
        avail = vmem_tile_budget - fixed
        if avail < 128 * per_tc:
            continue                                      # try a smaller batch tile
        tc_budget = (avail // per_tc) // 128 * 128
        tc_bytes = _round_up(max(target_tile_bytes // max(D * itemsize, 1), 1), granule)
        tc_steps = max(granule, (c_pad // min_grid_steps) // granule * granule)
        tc = max(128, min(tc_budget, tc_bytes, tc_steps, c_pad))
        return tb, tc

    raise ValueError(
        "MagFace Pallas kernel: even an (8, 128) batch/class tile does not fit "
        f"the VMEM tile budget ({vmem_tile_budget} bytes) at feat_dim={D}; "
        "reduce feat_dim or raise the VMEM budget.")


def _make_magface_kernel(num_class):
    """Kernel producing one (TB, TC) tile of the scaled logits."""

    def kernel(labels_ref, cosm_ref, sinm_ref, feats_ref, w_ref, out_ref):
        j = pl.program_id(0)                     # class-tile index (outer grid axis)
        tc = out_ref.shape[1]

        w = w_ref[...]                           # (TC, D) raw streamed weight tile

        # Row L2 norms via a tiny MXU matmul: ones(1, D) contracted with (w*w)
        # over the feature dim gives a (1, TC) sum-of-squares row that is
        # already in the lane-major layout needed for the post-matmul column
        # rescale (no (TC,1)->(1,TC) relayout, no full-tile cast round-trip).
        sq = w * w
        ones_row = jnp.ones((1, w.shape[1]), dtype=w.dtype)
        w_sq = jax.lax.dot_general(
            ones_row, sq,
            dimension_numbers=(((1,), (1,)), ((), ())),
            preferred_element_type=jnp.float32)                    # (1, TC)
        # F.normalize semantics: 1 / max(||w||, 1e-12), via EUP rsqrt.
        rinv = jax.lax.rsqrt(jnp.maximum(w_sq, 1e-24))             # (1, TC)

        # Cosine logits: contract the feature dim of BOTH operands (no weight
        # transpose materialized), then rescale columns by 1/||w_c||.
        cos_theta = jax.lax.dot_general(
            feats_ref[...], w,
            dimension_numbers=(((1,), (1,)), ((), ())),
            preferred_element_type=jnp.float32)                    # (TB, TC)
        cos_theta = jnp.clip(cos_theta * rinv, -1.0, 1.0)

        # Additive angular margin from precomputed per-sample cos_m / sin_m.
        cos_m = cosm_ref[...]                                      # (TB, 1)
        sin_m = sinm_ref[...]                                      # (TB, 1)
        sin_theta = jnp.sqrt(jnp.maximum(1.0 - cos_theta * cos_theta, 0.0))
        cos_theta_m = cos_theta * cos_m - sin_theta * sin_m
        # min_cos_theta = cos(pi - margin) == -cos_m (one fewer transcendental).
        adjusted = jnp.where(cos_theta > -cos_m, cos_theta_m, cos_theta - MARGIN_AM)

        # Scatter the margin-adjusted logit at each sample's label column.
        col = jax.lax.broadcasted_iota(jnp.int32, cos_theta.shape, 1) + j * tc
        out = jnp.where(col == labels_ref[...], adjusted, cos_theta) * SCALE
        # Zero padded class columns of the last tile so garbage weight rows can
        # never leak NaN/Inf (those columns are dropped at writeback anyway).
        out_ref[...] = jnp.where(col < num_class, out, 0.0)

    return kernel


def magface_forward(feats, labels, weight, *, max_batch_tile=256,
                    min_grid_steps=8, target_tile_bytes=4 * 1024 * 1024):
    """feats: (B, D), labels: (B,) int, weight: (C, D).  Returns (logits, loss_g)."""
    B, D = feats.shape
    C, D2 = weight.shape
    assert D == D2, (feats.shape, weight.shape)

    vmem_limit, tile_budget = _vmem_budgets()

    # --- per-sample, class-tile-invariant quantities (O(B*D); tiny vs C*D) -----
    feats32 = feats.astype(jnp.float32)
    x_norm_raw = jnp.sqrt(jnp.sum(feats32 * feats32, axis=1, keepdims=True))    # (B, 1)
    x_norm = jnp.clip(x_norm_raw, L_A, U_A)
    ada_margin = (U_MARGIN - L_MARGIN) / (U_A - L_A) * (x_norm - L_A) + L_MARGIN
    cos_m = jnp.cos(ada_margin)
    sin_m = jnp.sin(ada_margin)
    loss_g = LAMDA * ((1.0 / (U_A ** 2)) * x_norm + 1.0 / x_norm)               # (B, 1)
    # Normalized feats streamed in the weight's dtype (bf16 weights => bf16 feats).
    feats_n = (feats32 / jnp.maximum(x_norm_raw, 1e-12)).astype(weight.dtype)

    labels2d = labels.reshape(B, 1).astype(jnp.int32)

    TB, TC = _pick_tiles(B, C, D,
                         itemsize=weight.dtype.itemsize,
                         vmem_tile_budget=tile_budget,
                         max_batch_tile=max_batch_tile,
                         min_grid_steps=min_grid_steps,
                         target_tile_bytes=target_tile_bytes)

    # Class axis OUTER, batch axis INNER: each weight tile is streamed exactly
    # once and stays resident across the inner batch steps; feats/logits tiles
    # are much smaller and re-streamed per class tile.
    grid = (pl.cdiv(C, TC), pl.cdiv(B, TB))

    grid_spec = pltpu.PrefetchScalarGridSpec(
        num_scalar_prefetch=0,
        grid=grid,
        in_specs=[
            pl.BlockSpec((TB, 1), lambda j, b: (b, 0)),    # labels
            pl.BlockSpec((TB, 1), lambda j, b: (b, 0)),    # cos_m
            pl.BlockSpec((TB, 1), lambda j, b: (b, 0)),    # sin_m
            pl.BlockSpec((TB, D), lambda j, b: (b, 0)),    # normalized feats
            # Streamed weight class tile; block-invariant across inner batch
            # steps. (If small-D DMA is still exposed, sweep
            # pipeline_mode=pl.Buffered(3) here.)
            pl.BlockSpec((TC, D), lambda j, b: (j, 0)),
        ],
        out_specs=pl.BlockSpec((TB, TC), lambda j, b: (b, j)),   # disjoint tiles
    )

    logits = pl.pallas_call(
        _make_magface_kernel(C),
        out_shape=jax.ShapeDtypeStruct((B, C), jnp.float32),
        grid_spec=grid_spec,
        compiler_params=pltpu.CompilerParams(
            dimension_semantics=("parallel", "parallel"),
            vmem_limit_bytes=vmem_limit,
        ),
    )(labels2d, cos_m, sin_m, feats_n, weight)

    return logits, loss_g


def magface_reference(feats, labels, weight):
    """Pure-JAX reference mirroring the PyTorch forward."""
    x_norm_raw = jnp.linalg.norm(feats, axis=1, keepdims=True)
    x_norm = jnp.clip(x_norm_raw, L_A, U_A)
    ada_margin = (U_MARGIN - L_MARGIN) / (U_A - L_A) * (x_norm - L_A) + L_MARGIN
    cos_m, sin_m = jnp.cos(ada_margin), jnp.sin(ada_margin)
    loss_g = 1.0 / (U_A ** 2) * x_norm + 1.0 / x_norm
    w_n = weight / jnp.maximum(jnp.linalg.norm(weight, axis=1, keepdims=True), 1e-12)
    f_n = feats / jnp.maximum(x_norm_raw, 1e-12)
    cos_theta = jnp.clip(f_n @ w_n.T, -1.0, 1.0)
    sin_theta = jnp.sqrt(1.0 - cos_theta ** 2)
    cos_theta_m = cos_theta * cos_m - sin_theta * sin_m
    min_cos = jnp.cos(math.pi - ada_margin)
    cos_theta_m = jnp.where(cos_theta > min_cos, cos_theta_m, cos_theta - MARGIN_AM)
    one_hot = jax.nn.one_hot(labels, weight.shape[0], dtype=jnp.bool_)
    out = jnp.where(one_hot, cos_theta_m, cos_theta) * SCALE
    return out, LAMDA * loss_g


if __name__ == "__main__":
    key = jax.random.PRNGKey(0)

    def run_case(case_id, B, D, C, *, w_dtype=jnp.float32, max_batch_tile=256,
                 atol=5e-4, rtol=5e-4):
        kf, kw, kl = jax.random.split(jax.random.fold_in(key, case_id), 3)
        feats = jax.random.normal(kf, (B, D), dtype=jnp.float32)
        # Weight init mimicking torch.normal(0, 0.01, (C, D)).
        weight = (0.01 * jax.random.normal(kw, (C, D), dtype=jnp.float32)).astype(w_dtype)
        labels = jax.random.randint(kl, (B,), 0, C, dtype=jnp.int32)

        out, loss_g = magface_forward(feats, labels, weight,
                                      max_batch_tile=max_batch_tile)
        jax.block_until_ready((out, loss_g))

        ref_out, ref_loss_g = magface_reference(feats, labels,
                                                weight.astype(jnp.float32))
        assert jnp.allclose(out, ref_out, atol=atol, rtol=rtol), (case_id, B, D, C)
        assert jnp.allclose(loss_g, ref_loss_g, atol=1e-5, rtol=1e-5), (case_id, B, D, C)

    # 1) f32, 8 class tiles (megacore-friendly grid).
    run_case(1, B=8, D=128, C=1024)
    # 2) f32, C not a multiple of the tile: exercises the padded last class tile.
    run_case(2, B=8, D=128, C=1000)
    # 3) bf16 weight/feats streaming (half the HBM bytes), looser tolerance.
    run_case(3, B=8, D=256, C=2048, w_dtype=jnp.bfloat16, atol=1e-1, rtol=5e-2)
    # 4) batch-tiled path (B > batch tile, padded last batch tile).
    run_case(4, B=320, D=128, C=1024, max_batch_tile=128)

    print("KERNEL_OK")
</pallas_src>

<mosaic_0001>
module attributes {stable_mosaic.version = 11 : i64} {
  func.func @kernel(%arg0: i32, %arg1: i32, %arg2: memref<8x1xi32, #tpu.memory_space<vmem>>, %arg3: memref<8x1xf32, #tpu.memory_space<vmem>>, %arg4: memref<8x1xf32, #tpu.memory_space<vmem>>, %arg5: memref<8x128xf32, #tpu.memory_space<vmem>>, %arg6: memref<128x128xf32, #tpu.memory_space<vmem>>, %arg7: memref<8x128xf32, #tpu.memory_space<vmem>>) attributes {dimension_semantics = [#tpu.dimension_semantics<parallel>, #tpu.dimension_semantics<parallel>], iteration_bounds = array<i64: 8, 1>, scalar_prefetch = 0 : i64, scratch_operands = 0 : i64, tpu.core_type = #tpu.core_type<tc>, window_params = [{transform_indices = @transform_0, window_bounds = array<i64: 8, 1>}, {transform_indices = @transform_1, window_bounds = array<i64: 8, 1>}, {transform_indices = @transform_2, window_bounds = array<i64: 8, 1>}, {transform_indices = @transform_3, window_bounds = array<i64: 8, 128>}, {transform_indices = @transform_4, window_bounds = array<i64: 128, 128>}, {transform_indices = @transform_5, window_bounds = array<i64: 8, 128>}]} {
    %c0 = arith.constant 0 : index
    %c0_0 = arith.constant 0 : index
    %0 = vector.load %arg6[%c0, %c0_0] : memref<128x128xf32, #tpu.memory_space<vmem>>, vector<128x128xf32>
    %1 = arith.mulf %0, %0 : vector<128x128xf32>
    %cst = arith.constant 1.000000e+00 : f32
    %2 = vector.broadcast %cst : f32 to vector<1x128xf32>
    %cst_1 = arith.constant dense<0.000000e+00> : vector<1x128xf32>
    %3 = tpu.matmul %2, %1, %cst_1 {dimension_numbers = #tpu.dot_dimension_numbers<[1], [1], [0], [0], [0, 0, 1, 0], [], []>} : vector<1x128xf32>, vector<128x128xf32>, vector<1x128xf32> -> vector<1x128xf32>
    %cst_2 = arith.constant 1.000000e-24 : f32
    %4 = vector.broadcast %cst_2 : f32 to vector<1x128xf32>
    %5 = arith.maximumf %3, %4 : vector<1x128xf32>
    %6 = math.rsqrt %5 : vector<1x128xf32>
    %c0_3 = arith.constant 0 : index
    %c0_4 = arith.constant 0 : index
    %7 = vector.load %arg5[%c0_3, %c0_4] : memref<8x128xf32, #tpu.memory_space<vmem>>, vector<8x128xf32>
    %cst_5 = arith.constant dense<0.000000e+00> : vector<8x128xf32>
    %8 = tpu.matmul %7, %0, %cst_5 {dimension_numbers = #tpu.dot_dimension_numbers<[1], [1], [0], [0], [0, 0, 1, 0], [], []>} : vector<8x128xf32>, vector<128x128xf32>, vector<8x128xf32> -> vector<8x128xf32>
    %9 = vector.broadcast %6 : vector<1x128xf32> to vector<8x128xf32>
    %10 = arith.mulf %8, %9 : vector<8x128xf32>
    %cst_6 = arith.constant -1.000000e+00 : f32
    %cst_7 = arith.constant 1.000000e+00 : f32
    %11 = vector.broadcast %cst_6 : f32 to vector<8x128xf32>
    %12 = arith.maximumf %11, %10 : vector<8x128xf32>
    %13 = vector.broadcast %cst_7 : f32 to vector<8x128xf32>
    %14 = arith.minimumf %13, %12 : vector<8x128xf32>
    %c0_8 = arith.constant 0 : index
    %c0_9 = arith.constant 0 : index
    %15 = vector.load %arg3[%c0_8, %c0_9] : memref<8x1xf32, #tpu.memory_space<vmem>>, vector<8x1xf32>
    %c0_10 = arith.constant 0 : index
    %c0_11 = arith.constant 0 : index
    %16 = vector.load %arg4[%c0_10, %c0_11] : memref<8x1xf32, #tpu.memory_space<vmem>>, vector<8x1xf32>
    %17 = arith.mulf %14, %14 : vector<8x128xf32>
    %cst_12 = arith.constant 1.000000e+00 : f32
    %18 = vector.broadcast %cst_12 : f32 to vector<8x128xf32>
    %19 = arith.subf %18, %17 : vector<8x128xf32>
    %cst_13 = arith.constant 0.000000e+00 : f32
    %20 = vector.broadcast %cst_13 : f32 to vector<8x128xf32>
    %21 = arith.maximumf %19, %20 : vector<8x128xf32>
    %22 = math.sqrt %21 : vector<8x128xf32>
    %23 = vector.broadcast %15 : vector<8x1xf32> to vector<8x128xf32>
    %24 = arith.mulf %14, %23 : vector<8x128xf32>
    %25 = vector.broadcast %16 : vector<8x1xf32> to vector<8x128xf32>
    %26 = arith.mulf %22, %25 : vector<8x128xf32>
    %27 = arith.subf %24, %26 : vector<8x128xf32>
    %cst_14 = arith.constant 0.000000e+00 : f32
    %28 = vector.broadcast %cst_14 : f32 to vector<8x1xf32>
    %29 = arith.subf %28, %15 : vector<8x1xf32>
    %30 = vector.broadcast %29 : vector<8x1xf32> to vector<8x128xf32>
    %31 = arith.cmpf ogt, %14, %30 : vector<8x128xf32>
    %cst_15 = arith.constant 0.000000e+00 : f32
    %32 = vector.broadcast %cst_15 : f32 to vector<8x128xf32>
    %33 = arith.subf %14, %32 : vector<8x128xf32>
    %34 = arith.select %31, %27, %33 : vector<8x128xi1>, vector<8x128xf32>
    %35 = tpu.iota {dimensions = array<i32: 1>} : vector<8x128xi32>
    %c128_i32 = arith.constant 128 : i32
    %36 = arith.muli %arg0, %c128_i32 : i32
    %37 = vector.broadcast %36 : i32 to vector<8x128xi32>
    %38 = arith.addi %35, %37 : vector<8x128xi32>
    %c0_16 = arith.constant 0 : index
    %c0_17 = arith.constant 0 : index
    %39 = vector.load %arg2[%c0_16, %c0_17] : memref<8x1xi32, #tpu.memory_space<vmem>>, vector<8x1xi32>
    %40 = vector.broadcast %39 : vector<8x1xi32> to vector<8x128xi32>
    %41 = arith.cmpi eq, %38, %40 : vector<8x128xi32>
    %42 = arith.select %41, %34, %14 : vector<8x128xi1>, vector<8x128xf32>
    %cst_18 = arith.constant 3.200000e+01 : f32
    %43 = vector.broadcast %cst_18 : f32 to vector<8x128xf32>
    %44 = arith.mulf %42, %43 : vector<8x128xf32>
    %c1024_i32 = arith.constant 1024 : i32
    %45 = vector.broadcast %c1024_i32 : i32 to vector<8x128xi32>
    %46 = arith.cmpi slt, %38, %45 : vector<8x128xi32>
    %cst_19 = arith.constant 0.000000e+00 : f32
    %47 = vector.broadcast %cst_19 : f32 to vector<8x128xf32>
    %48 = arith.select %46, %44, %47 : vector<8x128xi1>, vector<8x128xf32>
    %c0_20 = arith.constant 0 : index
    %c0_21 = arith.constant 0 : index
    %49 = vector.load %arg7[%c0_20, %c0_21] : memref<8x128xf32, #tpu.memory_space<vmem>>, vector<8x128xf32>
    tpu.vector_store %arg7[%c0_20, %c0_21], %48 {strides = array<i32>} : memref<8x128xf32, #tpu.memory_space<vmem>>, vector<8x128xf32>,
    return
  }
  func.func @transform_0(%arg0: i32, %arg1: i32) -> (i32, i32) {
    %c0_i32 = arith.constant 0 : i32
    %c0_i32_0 = arith.constant 0 : i32
    return %arg1, %c0_i32 : i32, i32
  }
  func.func @transform_1(%arg0: i32, %arg1: i32) -> (i32, i32) {
    %c0_i32 = arith.constant 0 : i32
    %c0_i32_0 = arith.constant 0 : i32
    return %arg1, %c0_i32 : i32, i32
  }
  func.func @transform_2(%arg0: i32, %arg1: i32) -> (i32, i32) {
    %c0_i32 = arith.constant 0 : i32
    %c0_i32_0 = arith.constant 0 : i32
    return %arg1, %c0_i32 : i32, i32
  }
  func.func @transform_3(%arg0: i32, %arg1: i32) -> (i32, i32) {
    %c0_i32 = arith.constant 0 : i32
    %c0_i32_0 = arith.constant 0 : i32
    return %arg1, %c0_i32 : i32, i32
  }
  func.func @transform_4(%arg0: i32, %arg1: i32) -> (i32, i32) {
    %c0_i32 = arith.constant 0 : i32
    %c0_i32_0 = arith.constant 0 : i32
    return %arg0, %c0_i32 : i32, i32
  }
  func.func @transform_5(%arg0: i32, %arg1: i32) -> (i32, i32) {
    %c0_i32 = arith.constant 0 : i32
    return %arg1, %arg0 : i32, i32
  }
}

</mosaic_0001>

<llo_original>
// kernel: tpu_custom_call.1
$region0: #{tpu_custom_call.1}
  #allocation0 [shape = 'u32[]', space=smem, size = 0x4, offset = 0x4, fixed_abs, tag = 'smem constant byte address 0x4 - core index']
  #allocation1 [shape = 'u32[72,128]{1,0:T(1,128)}', space=vmem, size = 0x9000, scoped, tag = 'internal scratch']
  %s0 = inlined_call_operand.vmem [shape: s32[8,1], index: 0, kind: input, shape index: {}]
  %s1 = inlined_call_operand.vmem [shape: f32[8,1], index: 1, kind: input, shape index: {}]
  %s2 = inlined_call_operand.vmem [shape: f32[8,1], index: 2, kind: input, shape index: {}]
  %s3 = inlined_call_operand.vmem [shape: f32[8,128], index: 3, kind: input, shape index: {}]
  %s4 = inlined_call_operand.hbm [shape: f32[1024,128], index: 4, kind: input, shape index: {}]
  %s5 = inlined_call_operand.hbm [shape: f32[8,1024], index: 5, kind: output, shape index: {}]
  %s6 = sld [smem:[#allocation0]]
  $region57: #{tpu_custom_call.1} parent=0
    _
  %s8 = ssub.s32 1, %s6
  %s9 = scalar_select 0, %s8, %s6
  $region1: #{tpu_custom_call.1} parent=0
    #allocation2 [shape = 'u8[131072]{0}', space=vmem, size = 0x20000, scoped, tag = 'input window, operand 4']
    #allocation3 [shape = 's32[2]{0}', space=sflag, size = 0x8, scoped, tag = 'scoped memory for tpu_custom_call.1']
    #allocation4 [shape = 's32[2]{0}', space=sflag, size = 0x8, scoped, tag = 'scoped memory for tpu_custom_call.1']
    #allocation5 [shape = 'u8[8192]{0}', space=vmem, size = 0x2000, scoped, tag = 'output window, operand 0']
    %10 = vsyncpa [#allocation3], 0
    %s11 = scalar_lea.sflag [#allocation3], 1
    %12 = vsyncpa %s11, 0
    %13 = vsyncpa [#allocation4], 0
    %s14 = scalar_lea.sflag [#allocation4], 1
    %15 = vsyncpa %s14, 0
    loop: start=0, step=1, limit=10
    $region2: #{tpu_custom_call.1} parent=1 // loop_pre_header
      _
    $region3: #{tpu_custom_call.1} parent=1 // loop_header
      %s17 = sphi 0, %s21
      %p18 = scmp.ge.s32.totalorder %s17, 10
      %s24 = sphi 0, %s36
      %s25 = sphi 0, %s32
      %s26 = sphi 0, %s24
      %s27 = sphi 0, %s25
      %s28 = sphi 0, %s26
      %s29 = sphi 0, %s27
      %s39 = sphi 0, %s41
      %s42 = sphi 0, %s39
      %s43 = sphi 0, %s42
      %s59 = sphi 0, %s43
      %s65 = sphi 0, %s67
      %s68 = sphi 0, %s65
      %s69 = sphi 0, %s68
      %s85 = sphi 0, %s69
      %s91 = sphi 0, %s93
      %s94 = sphi 0, %s91
      %s95 = sphi 0, %s94
      %s111 = sphi 0, %s95
      %s117 = sphi 0, %s119
      %s120 = sphi 0, %s117
      %s121 = sphi 0, %s120
      %s137 = sphi 0, %s121
      %s143 = sphi 0, %s145
      %s146 = sphi 0, %s143
      %s147 = sphi 0, %s146
      %s163 = sphi 0, %s147
      %s171 = sphi 0, %s173
      %s174 = sphi 0, %s171
      %s175 = sphi 0, %s174
      %s191 = sphi 0, %s175
    $region4: #{tpu_custom_call.1} parent=1 // loop_header_branch
      %20 = sbr.rel (%p18) target = $region8
    $region5: #{tpu_custom_call.1} parent=1 // loop_body
      %s22 = ssub.s32 %s17, 1
      %s23 = ssub.s32 %s17, 2
      %s30 = sadd.s32 1, %s25
      %p31 = scmp.ge.s32.totalorder %s30, 1
      %s32 = scalar_select %p31, 0, %s30
      %s33 = sadd.s32 1, %s24
      %s34 = scalar_select %p31, %s33, %s24
      %p35 = scmp.ge.s32.totalorder %s34, 8
      %s36 = scalar_select %p35, 0, %s34
      %s37 = ssub.s32 %s25, %s32
      %p38 = scmp.eq.s32.totalorder %s37, 0
      %s40 = sadd.s32 %s39, 1
      %s41 = scalar_select %p38, %s39, %s40
      %p44 = pneg %p38
      %p45 = scmp.eq.s32.totalorder %s17, 7
      %p46 = por %p44, %p45
      %p47 = scmp.ne.s32.totalorder %s39, %s42
      %p48 = scmp.eq.s32.totalorder %s17, 0
      %p49 = por %p47, %p48
      %p50 = scmp.ne.s32.totalorder %s39, %s42
      %p51 = scmp.eq.s32.totalorder %s22, 7
      %p52 = por %p50, %p51
      %p53 = scmp.ne.s32.totalorder %s42, %s43
      %p54 = scmp.eq.s32.totalorder %s22, 0
      %p55 = por %p53, %p54
      %p56 = scmp.ne.s32.totalorder %s42, %s43
      %p57 = scmp.eq.s32.totalorder %s23, 7
      %p58 = por %p56, %p57
      %p60 = scmp.ne.s32.totalorder %s43, %s59
      %p61 = scmp.eq.s32.totalorder %s23, 0
      %p62 = por %p60, %p61
      %s63 = ssub.s32 %s25, %s32
      %p64 = scmp.eq.s32.totalorder %s63, 0
      %s66 = sadd.s32 %s65, 1
      %s67 = scalar_select %p64, %s65, %s66
      %p70 = pneg %p64
      %p71 = scmp.eq.s32.totalorder %s17, 7
      %p72 = por %p70, %p71
      %p73 = scmp.ne.s32.totalorder %s65, %s68
      %p74 = scmp.eq.s32.totalorder %s17, 0
      %p75 = por %p73, %p74
      %p76 = scmp.ne.s32.totalorder %s65, %s68
      %p77 = scmp.eq.s32.totalorder %s22, 7
      %p78 = por %p76, %p77
      %p79 = scmp.ne.s32.totalorder %s68, %s69
      %p80 = scmp.eq.s32.totalorder %s22, 0
      %p81 = por %p79, %p80
      %p82 = scmp.ne.s32.totalorder %s68, %s69
      %p83 = scmp.eq.s32.totalorder %s23, 7
      %p84 = por %p82, %p83
      %p86 = scmp.ne.s32.totalorder %s69, %s85
      %p87 = scmp.eq.s32.totalorder %s23, 0
      %p88 = por %p86, %p87
      %s89 = ssub.s32 %s25, %s32
      %p90 = scmp.eq.s32.totalorder %s89, 0
      %s92 = sadd.s32 %s91, 1
      %s93 = scalar_select %p90, %s91, %s92
      %p96 = pneg %p90
      %p97 = scmp.eq.s32.totalorder %s17, 7
      %p98 = por %p96, %p97
      %p99 = scmp.ne.s32.totalorder %s91, %s94
      %p100 = scmp.eq.s32.totalorder %s17, 0
      %p101 = por %p99, %p100
      %p102 = scmp.ne.s32.totalorder %s91, %s94
      %p103 = scmp.eq.s32.totalorder %s22, 7
      %p104 = por %p102, %p103
      %p105 = scmp.ne.s32.totalorder %s94, %s95
      %p106 = scmp.eq.s32.totalorder %s22, 0
      %p107 = por %p105, %p106
      %p108 = scmp.ne.s32.totalorder %s94, %s95
      %p109 = scmp.eq.s32.totalorder %s23, 7
      %p110 = por %p108, %p109
      %p112 = scmp.ne.s32.totalorder %s95, %s111
      %p113 = scmp.eq.s32.totalorder %s23, 0
      %p114 = por %p112, %p113
      %s115 = ssub.s32 %s25, %s32
      %p116 = scmp.eq.s32.totalorder %s115, 0
      %s118 = sadd.s32 %s117, 1
      %s119 = scalar_select %p116, %s117, %s118
      %p122 = pneg %p116
      %p123 = scmp.eq.s32.totalorder %s17, 7
      %p124 = por %p122, %p123
      %p125 = scmp.ne.s32.totalorder %s117, %s120
      %p126 = scmp.eq.s32.totalorder %s17, 0
      %p127 = por %p125, %p126
      %p128 = scmp.ne.s32.totalorder %s117, %s120
      %p129 = scmp.eq.s32.totalorder %s22, 7
      %p130 = por %p128, %p129
      %p131 = scmp.ne.s32.totalorder %s120, %s121
      %p132 = scmp.eq.s32.totalorder %s22, 0
      %p133 = por %p131, %p132
      %p134 = scmp.ne.s32.totalorder %s120, %s121
      %p135 = scmp.eq.s32.totalorder %s23, 7
      %p136 = por %p134, %p135
      %p138 = scmp.ne.s32.totalorder %s121, %s137
      %p139 = scmp.eq.s32.totalorder %s23, 0
      %p140 = por %p138, %p139
      %s141 = ssub.s32 %s24, %s36
      %p142 = scmp.eq.s32.totalorder %s141, 0
      %s144 = sadd.s32 %s143, 1
      %s145 = scalar_select %p142, %s143, %s144
      %p148 = pneg %p142
      %p149 = scmp.eq.s32.totalorder %s17, 7
      %p150 = por %p148, %p149
      %p151 = scmp.ne.s32.totalorder %s143, %s146
      %p152 = scmp.eq.s32.totalorder %s17, 0
      %p153 = por %p151, %p152
      %p154 = scmp.ne.s32.totalorder %s143, %s146
      %p155 = scmp.eq.s32.totalorder %s22, 7
      %p156 = por %p154, %p155
      %p157 = scmp.ne.s32.totalorder %s146, %s147
      %p158 = scmp.eq.s32.totalorder %s22, 0
      %p159 = por %p157, %p158
      %p160 = scmp.ne.s32.totalorder %s146, %s147
      %p161 = scmp.eq.s32.totalorder %s23, 7
      %p162 = por %p160, %p161
      %p164 = scmp.ne.s32.totalorder %s147, %s163
      %p165 = scmp.eq.s32.totalorder %s23, 0
      %p166 = por %p164, %p165
      %s167 = ssub.s32 %s25, %s32
      %s168 = ssub.s32 %s24, %s36
      %s169 = sor.u32 %s167, %s168
      %p170 = scmp.eq.s32.totalorder %s169, 0
      %s172 = sadd.s32 %s171, 1
      %s173 = scalar_select %p170, %s171, %s172
      %p176 = pneg %p170
      %p177 = scmp.eq.s32.totalorder %s17, 7
      %p178 = por %p176, %p177
      %p179 = scmp.ne.s32.totalorder %s171, %s174
      %p180 = scmp.eq.s32.totalorder %s17, 0
      %p181 = por %p179, %p180
      %p182 = scmp.ne.s32.totalorder %s171, %s174
      %p183 = scmp.eq.s32.totalorder %s22, 7
      %p184 = por %p182, %p183
      %p185 = scmp.ne.s32.totalorder %s174, %s175
      %p186 = scmp.eq.s32.totalorder %s22, 0
      %p187 = por %p185, %p186
      %p188 = scmp.ne.s32.totalorder %s174, %s175
      %p189 = scmp.eq.s32.totalorder %s23, 7
      %p190 = por %p188, %p189
      %p192 = scmp.ne.s32.totalorder %s175, %s191
      %p193 = scmp.eq.s32.totalorder %s23, 0
      %p194 = por %p192, %p193
      %p195 = scmp.le.s32.totalorder 1, %s17
      %p196 = scmp.lt.s32.totalorder %s17, 9
      %p197 = pnand %p195, %p196
      %p198 = pneg %p197
      // Predicated region
      $region9: #{tpu_custom_call.1} parent=5 // pred_check
        _
      $region10: #{tpu_custom_call.1} parent=5 // pred_check_branch
        %200 = sbr.rel (%p197) target = $region12
      $region11: #{tpu_custom_call.1} parent=5 // pred_region
        %s201 = ssub.s32 %s17, 1
        // Predicated region
        $region13: #{tpu_custom_call.1} parent=11 // pred_check
          %p202 = pneg %p55
        $region14: #{tpu_custom_call.1} parent=11 // pred_check_branch
          %204 = sbr.rel (%p202) target = $region16
        $region15: #{tpu_custom_call.1} parent=11 // pred_region
          %p205 = scmp.lt.s32.totalorder %s27, 0
          %s206 = scalar_select %p205, %s27, 0
          %s207 = smul.addr %s206, 8
          %s208 = scalar_lea.vmem %s0, %s207
        $region16: #{tpu_custom_call.1} parent=11 // pred_fallthru
          _
        // Predicated region
        $region17: #{tpu_custom_call.1} parent=11 // pred_check
          %p209 = pneg %p81
        $region18: #{tpu_custom_call.1} parent=11 // pred_check_branch
          %211 = sbr.rel (%p209) target = $region20
        $region19: #{tpu_custom_call.1} parent=11 // pred_region
          %p212 = scmp.lt.s32.totalorder %s27, 0
          %s213 = scalar_select %p212, %s27, 0
          %s214 = smul.addr %s213, 8
          %s215 = scalar_lea.vmem %s1, %s214
        $region20: #{tpu_custom_call.1} parent=11 // pred_fallthru
          _
        // Predicated region
        $region21: #{tpu_custom_call.1} parent=11 // pred_check
          %p216 = pneg %p107
        $region22: #{tpu_custom_call.1} parent=11 // pred_check_branch
          %218 = sbr.rel (%p216) target = $region24
        $region23: #{tpu_custom_call.1} parent=11 // pred_region
          %p219 = scmp.lt.s32.totalorder %s27, 0
          %s220 = scalar_select %p219, %s27, 0
          %s221 = smul.addr %s220, 8
          %s222 = scalar_lea.vmem %s2, %s221
        $region24: #{tpu_custom_call.1} parent=11 // pred_fallthru
          _
        // Predicated region
        $region25: #{tpu_custom_call.1} parent=11 // pred_check
          %p223 = pneg %p133
        $region26: #{tpu_custom_call.1} parent=11 // pred_check_branch
          %225 = sbr.rel (%p223) target = $region28
        $region27: #{tpu_custom_call.1} parent=11 // pred_region
          %p226 = scmp.lt.s32.totalorder %s27, 0
          %s227 = scalar_select %p226, %s27, 0
          %s228 = smul.addr %s227, 8
          %s229 = scalar_lea.vmem %s3, %s228
        $region28: #{tpu_custom_call.1} parent=11 // pred_fallthru
          _
      $region12: #{tpu_custom_call.1} parent=5 // pred_fallthru
        _
      %p230 = scmp.lt.s32.totalorder %s17, 8
      // Predicated region
      $region29: #{tpu_custom_call.1} parent=5 // pred_check
        %p231 = pneg %p230
      $region30: #{tpu_custom_call.1} parent=5 // pred_check_branch
        %233 = sbr.rel (%p231) target = $region32
      $region31: #{tpu_custom_call.1} parent=5 // pred_region
        // Predicated region
        $region33: #{tpu_custom_call.1} parent=31 // pred_check
          %p234 = pneg %p153
        $region34: #{tpu_custom_call.1} parent=31 // pred_check_branch
          %236 = sbr.rel (%p234) target = $region36
        $region35: #{tpu_custom_call.1} parent=31 // pred_region
          %s237 = sand.u32 %s143, 1
          %s238 = scalar_lea.sflag [#allocation3], %s237
          %s239 = sand.u32 %s143, 1
          %s240 = smul.addr %s239, 128
          %s241 = scalar_lea.vmem [#allocation2], %s240
          %s242 = smul.u32 16, %s24
          %244 = vsyncadd %s238, 0
          %s245 = smul.addr %s242, 8
          %s246 = scalar_lea.hbm %s4, %s245
          %s247 = sshll.u32 %s246, 4
          %s248 = int_to_ptr.hbm [resolvable:$true] %s247
          %s249 = sshll.u32 %s241, 4
          %s250 = int_to_ptr.vmem [resolvable:$true] %s249
          %255 = dma.hbm_to_vmem [thread:$0]  %s248, 2048, %s250, %s238, 128, 128, 8
        $region36: #{tpu_custom_call.1} parent=31 // pred_fallthru
          _
      $region32: #{tpu_custom_call.1} parent=5 // pred_fallthru
        _
      %p256 = scmp.le.s32.totalorder 1, %s17
      %p257 = scmp.lt.s32.totalorder %s17, 9
      %p258 = pnand %p256, %p257
      %p259 = pneg %p258
      // Predicated region
      $region37: #{tpu_custom_call.1} parent=5 // pred_check
        _
      $region38: #{tpu_custom_call.1} parent=5 // pred_check_branch
        %261 = sbr.rel (%p258) target = $region40
      $region39: #{tpu_custom_call.1} parent=5 // pred_region
        %s262 = ssub.s32 %s17, 1
        %s263 = sand.u32 %s146, 1
        %s264 = scalar_lea.sflag [#allocation3], %s263
        %s265 = sand.u32 %s146, 1
        %s266 = smul.addr %s265, 128
        %s267 = scalar_lea.vmem [#allocation2], %s266
        // Predicated region
        $region41: #{tpu_custom_call.1} parent=39 // pred_check
          %p268 = pneg %p159
        $region42: #{tpu_custom_call.1} parent=39 // pred_check_branch
          %270 = sbr.rel (%p268) target = $region44
        $region43: #{tpu_custom_call.1} parent=39 // pred_region
          %272 = dma.done %s264, 2048
        $region44: #{tpu_custom_call.1} parent=39 // pred_fallthru
          _
        %p273 = scmp.lt.s32.totalorder %s27, 0
        %s274 = scalar_select %p273, %s27, 0
        %s275 = smul.addr %s274, 8
        %s276 = scalar_lea.vmem %s0, %s275
        %p277 = pneg %p55
        %p278 = pneg %p52
        %p279 = scmp.lt.s32.totalorder %s27, 0
        %s280 = scalar_select %p279, %s27, 0
        %s281 = smul.addr %s280, 8
        %s282 = scalar_lea.vmem %s1, %s281
        %p283 = pneg %p81
        %p284 = pneg %p78
        %p285 = scmp.lt.s32.totalorder %s27, 0
        %s286 = scalar_select %p285, %s27, 0
        %s287 = smul.addr %s286, 8
        %s288 = scalar_lea.vmem %s2, %s287
        %p289 = pneg %p107
        %p290 = pneg %p104
        %p291 = scmp.lt.s32.totalorder %s27, 0
        %s292 = scalar_select %p291, %s27, 0
        %s293 = smul.addr %s292, 8
        %s294 = scalar_lea.vmem %s3, %s293
        %p295 = pneg %p133
        %p296 = pneg %p130
        %s297 = sand.u32 %s146, 1
        %s298 = scalar_lea.sflag [#allocation3], %s297
        %s299 = sand.u32 %s146, 1
        %s300 = smul.addr %s299, 128
        %s301 = scalar_lea.vmem [#allocation2], %s300
        %p302 = pneg %p159
        %p303 = pneg %p156
        %p304 = pneg %p187
        %p305 = pneg %p184
        %s306 = sand.u32 %s174, 1
        %s307 = scalar_lea.sflag [#allocation4], %s306
        %s308 = sand.u32 %s174, 1
        %s309 = smul.addr %s308, 8
        %s310 = scalar_lea.vmem [#allocation5], %s309
        %p311 = scmp.lt.s32.totalorder %s27, 0
        %s312 = scalar_select %p311, %s27, 0
        %s313 = smul.addr %s312, 8
        %s314 = scalar_lea.vmem %s0, %s313
        %p315 = scmp.lt.s32.totalorder %s27, 0
        %s316 = scalar_select %p315, %s27, 0
        %s317 = smul.addr %s316, 8
        %s318 = scalar_lea.vmem %s1, %s317
        %p319 = scmp.lt.s32.totalorder %s27, 0
        %s320 = scalar_select %p319, %s27, 0
        %s321 = smul.addr %s320, 8
        %s322 = scalar_lea.vmem %s2, %s321
        %p323 = scmp.lt.s32.totalorder %s27, 0
        %s324 = scalar_select %p323, %s27, 0
        %s325 = smul.addr %s324, 8
        %s326 = scalar_lea.vmem %s3, %s325
        %s327 = smul.u32 16, %s26
        %v328 = vld [vmem:[%s267] sm:$0xff]
        %v329 = vld [vmem:[%s267 + $0x8] sm:$0xff]
        %v330 = vld [vmem:[%s267 + $0x10] sm:$0xff]
        %v331 = vld [vmem:[%s267 + $0x18] sm:$0xff]
        %v332 = vld [vmem:[%s267 + $0x20] sm:$0xff]
        %v333 = vld [vmem:[%s267 + $0x28] sm:$0xff]
        %v334 = vld [vmem:[%s267 + $0x30] sm:$0xff]
        %v335 = vld [vmem:[%s267 + $0x38] sm:$0xff]
        %v336 = vld [vmem:[%s267 + $0x40] sm:$0xff]
        %v337 = vld [vmem:[%s267 + $0x48] sm:$0xff]
        %v338 = vld [vmem:[%s267 + $0x50] sm:$0xff]
        %v339 = vld [vmem:[%s267 + $0x58] sm:$0xff]
        %v340 = vld [vmem:[%s267 + $0x60] sm:$0xff]
        %v341 = vld [vmem:[%s267 + $0x68] sm:$0xff]
        %v342 = vld [vmem:[%s267 + $0x70] sm:$0xff]
        %v343 = vld [vmem:[%s267 + $0x78] sm:$0xff]
        %v344 = vmul.f32 %v328, %v328
        %v345 = vmul.f32 %v329, %v329
        %v346 = vmul.f32 %v330, %v330
        %v347 = vmul.f32 %v331, %v331
        %v348 = vmul.f32 %v332, %v332
        %v349 = vmul.f32 %v333, %v333
        %v350 = vmul.f32 %v334, %v334
        %v351 = vmul.f32 %v335, %v335
        %v352 = vmul.f32 %v336, %v336
        %v353 = vmul.f32 %v337, %v337
        %v354 = vmul.f32 %v338, %v338
        %v355 = vmul.f32 %v339, %v339
        %v356 = vmul.f32 %v340, %v340
        %v357 = vmul.f32 %v341, %v341
        %v358 = vmul.f32 %v342, %v342
        %v359 = vmul.f32 %v343, %v343
        %360 = vmatpush.xpose.msra.mxu0 %v359
        %361 = vmatpush.xpose.msra.mxu0 %v358
        %362 = vmatpush.xpose.msra.mxu0 %v357
        %363 = vmatpush.xpose.msra.mxu0 %v356
        %364 = vmatpush.xpose.msra.mxu0 %v355
        %365 = vmatpush.xpose.msra.mxu0 %v354
        %366 = vmatpush.xpose.msra.mxu0 %v353
        %367 = vmatpush.xpose.msra.mxu0 %v352
        %368 = vmatpush.xpose.msra.mxu0 %v351
        %369 = vmatpush.xpose.msra.mxu0 %v350
        %370 = vmatpush.xpose.msra.mxu0 %v349
        %371 = vmatpush.xpose.msra.mxu0 %v348
        %372 = vmatpush.xpose.msra.mxu0 %v347
        %373 = vmatpush.xpose.msra.mxu0 %v346
        %374 = vmatpush.xpose.msra.mxu0 %v345
        %375 = vmatpush.xpose.msra.mxu0 %v344
        %376 = vmatmul.f32.gmra.mxu0 1.0
        %v377 = vpop.f32.mrf.mxu0
        %v378 = vadd.f32 0.0, %v377
        %379 = vdwg.mxu0
        %v380 = vmax.f32 %v378, 1e-24
        %v381 = vrsqrt.pop %v380
        %v382 = vmul.f32 %v381, %v380
        %v383 = vmul.f32 %v382, %v381
        %v384 = vmul.f32 0.5, %v383
        %v385 = vsub.f32 1.5, %v384
        %v386 = vmul.f32 %v381, %v385
        %vm387 = vweird.f32 %v380
        %vm388 = vweird.f32 %v381
        %vm389 = vmor %vm387, %vm388
        %v390 = vsel %vm389, %v381, %v386
        %v391 = vld [vmem:[%s326] sm:$0xff]
        %392 = vmatpush.xpose.msra.mxu0 %v343
        %393 = vmatpush.xpose.msra.mxu0 %v342
        %394 = vmatpush.xpose.msra.mxu0 %v341
        %395 = vmatpush.xpose.msra.mxu0 %v340
        %396 = vmatpush.xpose.msra.mxu0 %v339
        %397 = vmatpush.xpose.msra.mxu0 %v338
        %398 = vmatpush.xpose.msra.mxu0 %v337
        %399 = vmatpush.xpose.msra.mxu0 %v336
        %400 = vmatpush.xpose.msra.mxu0 %v335
        %401 = vmatpush.xpose.msra.mxu0 %v334
        %402 = vmatpush.xpose.msra.mxu0 %v333
        %403 = vmatpush.xpose.msra.mxu0 %v332
        %404 = vmatpush.xpose.msra.mxu0 %v331
        %405 = vmatpush.xpose.msra.mxu0 %v330
        %406 = vmatpush.xpose.msra.mxu0 %v329
        %407 = vmatpush.xpose.msra.mxu0 %v328
        %408 = vmatmul.f32.gmra.mxu0 %v391
        %v409 = vpop.f32.mrf.mxu0
        %v410 = vadd.f32 0.0, %v409
        %411 = vdwg.mxu0
        %v412 = vperm.slane %v390, 0
        %v413 = vmul.f32 %v410, %v412
        %v414 = vmax.f32 %v413, -1.0
        %v415 = vmin.f32 %v414, 1.0
        %v416 = vld [vmem:[%s318] sm:$0xff]
        %v417 = vld [vmem:[%s322] sm:$0xff]
        %v418 = vmul.f32 %v415, %v415
        %v419 = vsub.f32 1.0, %v418
        %v420 = vmax.f32 %v419, 0.0
        %v421 = vrsqrt.pop %v420
        %v422 = vmul.f32 %v421, %v420
        %v423 = vmul.f32 %v422, %v421
        %v424 = vmul.f32 0.5, %v423
        %v425 = vsub.f32 1.5, %v424
        %v426 = vmul.f32 %v421, %v425
        %v427 = vmul.f32 %v420, %v426
        %vm428 = vcmp.eq.f32.partialorder %v420, inf
        %v429 = vsel %vm428, %v420, %v427
        %vm430 = vcmp.eq.f32.partialorder %v420, 0.0
        %v431 = vand.u32 %v420, 2147483648
        %v432 = vsel %vm430, %v431, %v429
        %434 = vset.pattern.permute.xlu0 0
        %435 = vperm.xlu0 %434, %v416
        %v436 = vpop.permute.xlu0 %435
        %v438 = vmul.f32 %v415, %v436
        %440 = vset.pattern.permute.xlu0 0
        %441 = vperm.xlu0 %440, %v417
        %v442 = vpop.permute.xlu0 %441
        %v444 = vmul.f32 %v432, %v442
        %v445 = vsub.f32 %v438, %v444
        %v446 = vsub.f32 0.0, %v416
        %448 = vset.pattern.permute.xlu0 0
        %449 = vperm.xlu0 %448, %v446
        %v450 = vpop.permute.xlu0 %449
        %vm452 = vcmp.gt.f32.partialorder %v415, %v450
        %v453 = vsel %vm452, %v445, %v415
        %v454 = vlaneseq
        %v455 = vand.u32 %v454, 127
        %s456 = smul.u32 %s26, 128
        %v457 = vstv %s456
        %v458 = vadd.s32 %v455, %v457
        %v459 = vld [vmem:[%s314] sm:$0xff]
        %460 = vset.pattern.permute.xlu0 0
        %461 = vperm.xlu0 %460, %v459
        %v462 = vpop.permute.xlu0 %461
        %vm463 = vcmp.eq.s32.totalorder %v458, %v462
        %v464 = vsel %vm463, %v453, %v415
        %v465 = vmul.f32 %v464, 32.0
        %vm466 = vcmp.lt.s32.totalorder %v458, 1024
        %v467 = vsel %vm466, %v465, 0.0
        %468 = vst [vmem:[%s310] sm:$0xff] %v467
        %s469 = sand.u32 %s174, 1
        %s470 = scalar_lea.sflag [#allocation4], %s469
        %s471 = sand.u32 %s174, 1
        %s472 = smul.addr %s471, 8
        %s473 = scalar_lea.vmem [#allocation5], %s472
        // Predicated region
        $region45: #{tpu_custom_call.1} parent=39 // pred_check
          %p474 = pneg %p184
        $region46: #{tpu_custom_call.1} parent=39 // pred_check_branch
          %476 = sbr.rel (%p474) target = $region48
        $region47: #{tpu_custom_call.1} parent=39 // pred_region
          %478 = vsyncadd %s470, 0
          %s479 = smul.addr %s27, 8
          %s480 = sadd.s32 %s26, %s479
          %s481 = smul.addr %s480, 8
          %s482 = scalar_lea.hbm %s5, %s481
          %s484 = sshll.u32 %s473, 4
          %s485 = int_to_ptr.vmem [resolvable:$true] %s484
          %s486 = sshll.u32 %s482, 4
          %s487 = int_to_ptr.hbm [resolvable:$true] %s486
          %489 = dma.vmem_to_hbm [thread:$0]  %s485, 128, %s487, %s470
        $region48: #{tpu_custom_call.1} parent=39 // pred_fallthru
          _
      $region40: #{tpu_custom_call.1} parent=5 // pred_fallthru
        _
      %p490 = scmp.le.s32.totalorder 2, %s17
      // Predicated region
      $region49: #{tpu_custom_call.1} parent=5 // pred_check
        %p491 = pneg %p490
      $region50: #{tpu_custom_call.1} parent=5 // pred_check_branch
        %493 = sbr.rel (%p491) target = $region52
      $region51: #{tpu_custom_call.1} parent=5 // pred_region
        %s494 = ssub.s32 %s17, 2
        // Predicated region
        $region53: #{tpu_custom_call.1} parent=51 // pred_check
          %p495 = pneg %p190
        $region54: #{tpu_custom_call.1} parent=51 // pred_check_branch
          %497 = sbr.rel (%p495) target = $region56
        $region55: #{tpu_custom_call.1} parent=51 // pred_region
          %s498 = sand.u32 %s175, 1
          %s499 = scalar_lea.sflag [#allocation4], %s498
          %s500 = sand.u32 %s175, 1
          %s501 = smul.addr %s500, 8
          %s502 = scalar_lea.vmem [#allocation5], %s501
          %504 = dma.done %s499, 128
        $region56: #{tpu_custom_call.1} parent=51 // pred_fallthru
          _
      $region52: #{tpu_custom_call.1} parent=5 // pred_fallthru
        _
    $region6: #{tpu_custom_call.1} parent=1 // loop_footer
      %s21 = sadd.s32 1, %s17
    $region7: #{tpu_custom_call.1} parent=1 // loop_footer_branch
      %16 = sbr.rel target = $region3
    $region8: #{tpu_custom_call.1} parent=1 // loop_exit
      _
    %505 = vsyncpa [#allocation3], 1
    %s506 = scalar_lea.sflag [#allocation3], 1
    %507 = vsyncpa %s506, 1
    %508 = vsyncpa [#allocation4], 1
    %s509 = scalar_lea.sflag [#allocation4], 1
    %510 = vsyncpa %s509, 1

</llo_original>
